<compile_context>
chip_gen: v6e
topology: v6e:2x2x1
jax: 0.10.0
libtpu: 0.0.40
codegen_flags: <defaults>
</compile_context>

<pallas_src>
import functools

import jax
import jax.numpy as jnp
from jax.experimental import pallas as pl
from jax.experimental.pallas import tpu as pltpu


def _round_up(x, m):
    return ((x + m - 1) // m) * m


def _pad2(x, shape):
    pr, pc = shape[0] - x.shape[0], shape[1] - x.shape[1]
    if pr == 0 and pc == 0:
        return x
    return jnp.pad(x, ((0, pr), (0, pc)))


def _vmem_limit_bytes():
    """Generation-aware scoped-VMEM ceiling (v7x: 64 MiB/TC, v5e/v6e: 128 MiB)."""
    try:
        cap = int(pltpu.get_tpu_info().vmem_capacity_bytes)
    except Exception:
        cap = 64 * 1024 * 1024  # assume the smallest (v7x per-TC)
    return int(min(cap * 5 // 8, 100 * 1024 * 1024))


def _pick_row_tile(rows, cap=512):
    """Largest multiple of 128 <= cap that divides `rows` (rows is a mult. of 128)."""
    t = max(128, min(cap, rows) // 128 * 128)
    while rows % t:
        t -= 128
    return t


# ---------------------------------------------------------------------------
# Pre-kernel: HW = H_src @ W_neigh, tiled over source-row blocks.
# ---------------------------------------------------------------------------
def _rowproj_kernel(h_ref, w_ref, o_ref):
    o_ref[...] = jnp.dot(h_ref[...], w_ref[...],
                         preferred_element_type=jnp.float32).astype(o_ref.dtype)


def _row_projection(h_pad, w_p, rows, out_dtype=jnp.bfloat16):
    """Compute h_pad[:rows] @ w_p (extra rows of h_pad are simply never read)."""
    in_p = h_pad.shape[1]
    out_p = w_p.shape[1]
    tr = _pick_row_tile(rows)
    return pl.pallas_call(
        _rowproj_kernel,
        out_shape=jax.ShapeDtypeStruct((rows, out_p), out_dtype),
        grid_spec=pltpu.PrefetchScalarGridSpec(
            num_scalar_prefetch=0,
            grid=(rows // tr,),
            in_specs=[
                pl.BlockSpec((tr, in_p), lambda r: (r, 0)),
                pl.BlockSpec((in_p, out_p), lambda r: (0, 0)),   # weight resident
            ],
            out_specs=pl.BlockSpec((tr, out_p), lambda r: (r, 0)),
        ),
        compiler_params=pltpu.CompilerParams(
            dimension_semantics=("parallel",),
            vmem_limit_bytes=_vmem_limit_bytes(),
        ),
    )(h_pad, w_p)


# ---------------------------------------------------------------------------
# Main kernel: one fused SAGEConv('mean') layer, tiled over (n_dst, n_src).
#   acc (f32 scratch) accumulates mask @ HW across the K (src) grid axis;
#   sb  (f32 scratch) holds H_dst @ W_self + bias, computed once at k==0.
# ---------------------------------------------------------------------------
def _sage_layer_kernel(a_ref, hw_ref, hdst_ref, wself_ref, b_ref, dinv_ref,
                       o_ref, acc_ref, sb_ref, *, apply_relu):
    k = pl.program_id(1)

    # int8 0/1 mask -> bf16 is exact; MXU matmul with f32 accumulation.
    contrib = jnp.dot(a_ref[...].astype(jnp.bfloat16), hw_ref[...],
                      preferred_element_type=jnp.float32)

    @pl.when(k == 0)
    def _():
        acc_ref[...] = contrib                                   # no zero-init store
        sb_ref[...] = (jnp.dot(hdst_ref[...], wself_ref[...],    # self path out of
                               preferred_element_type=jnp.float32)  # the epilogue
                       + b_ref[...])

    @pl.when(k > 0)
    def _():
        acc_ref[...] += contrib

    # Finalize once per M tile: per-row mean normalization + self/bias (+ ReLU).
    @pl.when(k == pl.num_programs(1) - 1)
    def _():
        out = acc_ref[...] * dinv_ref[...] + sb_ref[...]
        if apply_relu:
            out = jnp.maximum(out, 0.0)
        o_ref[...] = out.astype(o_ref.dtype)


def sage_conv_pallas(a_mask, deg_inv, h_pad, w_self, w_neigh, bias, *,
                     apply_relu, out_dtype=jnp.bfloat16,
                     tm_max=1024, tk_max=1024):
    """One SAGEConv('mean') layer.

    a_mask : int8 [n_dst, n_src] 0/1 block adjacency
    deg_inv: f32  [n_dst] reciprocal in-degrees (row normalization of the mean)
    h_pad  : bf16 [rows, in_p] source features; in_p is a multiple of 128 with zero
             column padding; rows >= n_src (extra rows are ignored / harmless)
    Returns the padded output [n_dst_p, out_p]; valid region is [:n_dst, :out_feats]
    (padding columns are exactly zero, padding rows are finite junk).
    """
    n_dst, n_src = a_mask.shape
    in_feats, out_feats = w_self.shape
    in_p = h_pad.shape[1]
    out_p = _round_up(out_feats, 128)

    # ---- node-dim tiling --------------------------------------------------
    n_dst_128 = _round_up(n_dst, 128)
    # Cap tm so the "parallel" M axis has >= 2 tiles whenever n_dst allows it:
    # v7x shards this axis across its 2 TensorCores.
    two_tile_tm = max(128, _round_up((n_dst_128 + 1) // 2, 128))
    tm = min(tm_max, n_dst_128, two_tile_tm)
    tk = min(tk_max, _round_up(n_src, 128))
    n_dst_p = _round_up(n_dst, tm)
    n_src_p = _round_up(n_src, tk)
    h_rows = max(n_src_p, n_dst_p)

    # ---- operand prep (zero-padding only; no dtype pass over the big A) ----
    # TODO(synk): for large production blocks, materialize the int8 mask already
    # padded in the sampler so even this jnp.pad pass over A disappears.
    a_p = _pad2(a_mask, (n_dst_p, n_src_p))                              # int8
    dinv_p = _pad2(deg_inv.astype(jnp.float32).reshape(-1, 1), (n_dst_p, 1))
    if h_pad.shape[0] < h_rows:
        h_pad = jnp.pad(h_pad, ((0, h_rows - h_pad.shape[0]), (0, 0)))
    ws_p = _pad2(w_self, (in_p, out_p)).astype(jnp.bfloat16)
    wn_p = _pad2(w_neigh, (in_p, out_p)).astype(jnp.bfloat16)
    b_p = _pad2(bias.reshape(1, -1), (1, out_p)).astype(jnp.float32)

    # ---- precompute HW = H_src @ W_neigh once per layer ---------------------
    hw = _row_projection(h_pad, wn_p, rows=n_src_p, out_dtype=jnp.bfloat16)

    # Triple-buffer the sole large HBM stream (the int8 mask) to keep DMA saturated.
    try:
        a_spec = pl.BlockSpec((tm, tk), lambda i, k: (i, k),
                              pipeline_mode=pl.Buffered(3))
    except TypeError:  # older/newer API without pipeline_mode: fall back to default
        a_spec = pl.BlockSpec((tm, tk), lambda i, k: (i, k))

    grid = (n_dst_p // tm, n_src_p // tk)
    kernel = functools.partial(_sage_layer_kernel, apply_relu=apply_relu)

    out_padded = pl.pallas_call(
        kernel,
        out_shape=jax.ShapeDtypeStruct((n_dst_p, out_p), out_dtype),
        grid_spec=pltpu.PrefetchScalarGridSpec(
            num_scalar_prefetch=0,
            grid=grid,
            in_specs=[
                a_spec,                                            # A mask (int8)
                pl.BlockSpec((tk, out_p), lambda i, k: (k, 0)),    # HW tile
                pl.BlockSpec((tm, in_p), lambda i, k: (i, 0)),     # H_dst tile
                pl.BlockSpec((in_p, out_p), lambda i, k: (0, 0)),  # W_self (resident)
                pl.BlockSpec((1, out_p), lambda i, k: (0, 0)),     # bias (resident)
                pl.BlockSpec((tm, 1), lambda i, k: (i, 0)),        # deg_inv (per-M)
            ],
            out_specs=pl.BlockSpec((tm, out_p), lambda i, k: (i, 0)),
            scratch_shapes=[pltpu.VMEM((tm, out_p), jnp.float32),  # neighbor acc
                            pltpu.VMEM((tm, out_p), jnp.float32)], # self + bias
        ),
        compiler_params=pltpu.CompilerParams(
            dimension_semantics=("parallel", "arbitrary"),
            vmem_limit_bytes=_vmem_limit_bytes(),
        ),
    )(a_p, hw, h_pad, ws_p, b_p, dinv_p)

    return out_padded


# ---------------------------------------------------------------------------
# SAGE.forward (inference mode: dropout = identity, activation = ReLU)
# ---------------------------------------------------------------------------
def sage_forward(blocks, x, params, *, tm_max=1024, tk_max=1024):
    """blocks: list of (mask int8 [n_dst, n_src], deg_inv f32 [n_dst]) per layer.

    TODO(synk): the 'cached'-edge importance reweighting branch and the IS==1
    buffer-reweighting branch (which references an undefined global `A`) depend on
    DGL edge data / globals and are skipped (equivalent to in_degree=None, IS=0).
    """
    n_layers = len(params)
    # Pad + cast the input features once (lane-dense bf16 for the MXU); the
    # intermediate activations stay padded bf16 between layers (no re-pad passes,
    # padding columns are exactly zero and padding rows never reach valid outputs).
    in_p0 = _round_up(x.shape[1], 128)
    h = _pad2(x, (x.shape[0], in_p0)).astype(jnp.bfloat16)
    for l, ((mask, deg_inv), (w_self, w_neigh, b)) in enumerate(zip(blocks, params)):
        last = (l == n_layers - 1)
        h = sage_conv_pallas(
            mask, deg_inv, h, w_self, w_neigh, b,
            apply_relu=not last,
            out_dtype=jnp.float32 if last else jnp.bfloat16,
            tm_max=tm_max, tk_max=tk_max)
        # nn.Dropout in eval mode is identity -> nothing to do.
    n_dst_last = blocks[-1][0].shape[0]
    out_feats_last = params[-1][0].shape[1]
    return h[:n_dst_last, :out_feats_last]


# ---------------------------------------------------------------------------
# Deterministic parameter / input construction + plain-JAX reference
# ---------------------------------------------------------------------------
def xavier_uniform(key, shape):
    fan_in, fan_out = shape
    limit = (6.0 / (fan_in + fan_out)) ** 0.5
    return jax.random.uniform(key, shape, jnp.float32, -limit, limit)


def make_block(key, n_dst, n_src):
    """Block adjacency as (int8 0/1 mask, f32 reciprocal degrees)."""
    mask = jax.random.bernoulli(key, p=0.3, shape=(n_dst, n_src))
    # DGL blocks include the self edge (dst node i == src node i) -> nonzero degree.
    mask = mask.at[jnp.arange(n_dst), jnp.arange(n_dst)].set(True)
    deg = jnp.sum(mask.astype(jnp.float32), axis=1)
    return mask.astype(jnp.int8), 1.0 / deg


def reference_forward(blocks, x, params):
    h = x
    n_layers = len(params)
    for l, ((mask, deg_inv), (w_self, w_neigh, b)) in enumerate(zip(blocks, params)):
        n_dst = mask.shape[0]
        a_mean = mask.astype(jnp.float32) * deg_inv[:, None]
        h_dst = h[:n_dst]
        h = h_dst @ w_self + (a_mean @ h) @ w_neigh + b
        if l != n_layers - 1:
            h = jnp.maximum(h, 0.0)
    return h


if __name__ == "__main__":
    key = jax.random.PRNGKey(0)

    # 2-layer SAGE at small shapes; tm_max = tk_max = 128 below so the (M, K) grid
    # has >1 tile on both axes (exercises the accumulator, the self-path scratch and
    # the pipeline).  Production defaults are tm_max = tk_max = 1024.
    in_feats, n_hidden, n_classes = 64, 32, 8
    n_src0, n_dst0, n_dst1 = 320, 160, 48     # src of block1 = dst of block0

    keys = jax.random.split(key, 10)

    # input node features for the outermost block
    x = jax.random.normal(keys[0], (n_src0, in_feats), jnp.float32)

    # blocks as (int8 0/1 mask, f32 deg_inv) pairs [n_dst, n_src]
    blocks = [
        make_block(keys[1], n_dst0, n_src0),
        make_block(keys[2], n_dst1, n_dst0),
    ]

    # SAGEConv parameters (fc_self, fc_neigh, bias) per layer
    params = [
        (xavier_uniform(keys[3], (in_feats, n_hidden)),
         xavier_uniform(keys[4], (in_feats, n_hidden)),
         0.1 * jax.random.normal(keys[7], (1, n_hidden), jnp.float32)),
        (xavier_uniform(keys[5], (n_hidden, n_classes)),
         xavier_uniform(keys[6], (n_hidden, n_classes)),
         0.1 * jax.random.normal(keys[8], (1, n_classes), jnp.float32)),
    ]

    out = sage_forward(blocks, x, params, tm_max=128, tk_max=128)
    out = jax.block_until_ready(out)

    # correctness check against plain-JAX f32 reference (bf16 MXU operands -> loose tol)
    ref = reference_forward(blocks, x, params)
    assert out.shape == (n_dst1, n_classes)
    assert jnp.allclose(out.astype(jnp.float32), ref, atol=5e-2, rtol=5e-2), \
        float(jnp.max(jnp.abs(out.astype(jnp.float32) - ref)))

    print("KERNEL_OK")
</pallas_src>

<mosaic_0001>
module attributes {stable_mosaic.version = 11 : i64} {
  func.func @_rowproj_kernel(%arg0: i32, %arg1: memref<384x128xbf16, #tpu.memory_space<vmem>>, %arg2: memref<128x128xbf16, #tpu.memory_space<vmem>>, %arg3: memref<384x128xbf16, #tpu.memory_space<vmem>>) attributes {dimension_semantics = [#tpu.dimension_semantics<parallel>], iteration_bounds = array<i64: 1>, scalar_prefetch = 0 : i64, scratch_operands = 0 : i64, tpu.core_type = #tpu.core_type<tc>, window_params = [{transform_indices = @transform_0, window_bounds = array<i64: 384, 128>}, {pipeline_mode = #tpu.pipeline_mode<synchronous>, transform_indices = @transform_1, window_bounds = array<i64: 128, 128>}, {transform_indices = @transform_2, window_bounds = array<i64: 384, 128>}]} {
    %c0 = arith.constant 0 : index
    %c0_0 = arith.constant 0 : index
    %0 = vector.load %arg1[%c0, %c0_0] : memref<384x128xbf16, #tpu.memory_space<vmem>>, vector<384x128xbf16>
    %c0_1 = arith.constant 0 : index
    %c0_2 = arith.constant 0 : index
    %1 = vector.load %arg2[%c0_1, %c0_2] : memref<128x128xbf16, #tpu.memory_space<vmem>>, vector<128x128xbf16>
    %cst = arith.constant dense<0.000000e+00> : vector<384x128xf32>
    %2 = tpu.matmul %0, %1, %cst {dimension_numbers = #tpu.dot_dimension_numbers<[1], [0], [0], [1], [0, 0, 1, 1], [], []>} : vector<384x128xbf16>, vector<128x128xbf16>, vector<384x128xf32> -> vector<384x128xf32>
    %3 = arith.truncf %2 : vector<384x128xf32> to vector<384x128xbf16>
    %c0_3 = arith.constant 0 : index
    %c0_4 = arith.constant 0 : index
    %4 = vector.load %arg3[%c0_3, %c0_4] : memref<384x128xbf16, #tpu.memory_space<vmem>>, vector<384x128xbf16>
    tpu.vector_store %arg3[%c0_3, %c0_4], %3 {strides = array<i32>} : memref<384x128xbf16, #tpu.memory_space<vmem>>, vector<384x128xbf16>,
    return
  }
  func.func @transform_0(%arg0: i32) -> (i32, i32) {
    %c0_i32 = arith.constant 0 : i32
    %c0_i32_0 = arith.constant 0 : i32
    return %arg0, %c0_i32 : i32, i32
  }
  func.func @transform_1(%arg0: i32) -> (i32, i32) {
    %c0_i32 = arith.constant 0 : i32
    %c0_i32_0 = arith.constant 0 : i32
    %c0_i32_1 = arith.constant 0 : i32
    return %c0_i32, %c0_i32_0 : i32, i32
  }
  func.func @transform_2(%arg0: i32) -> (i32, i32) {
    %c0_i32 = arith.constant 0 : i32
    %c0_i32_0 = arith.constant 0 : i32
    return %arg0, %c0_i32 : i32, i32
  }
}

</mosaic_0001>

<llo_original>
// kernel: tpu_custom_call.1
$region0: #{tpu_custom_call.1}
  #allocation0 [shape = 'u32[]', space=smem, size = 0x4, offset = 0x4, fixed_abs, tag = 'smem constant byte address 0x4 - core index']
  #allocation1 [shape = 'u32[144,128]{1,0:T(1,128)}', space=vmem, size = 0x12000, scoped, tag = 'internal scratch']
  %s0 = inlined_call_operand.hbm [shape: bf16[384,128], index: 0, kind: input, shape index: {}]
  %s1 = inlined_call_operand.hbm [shape: bf16[128,128], index: 1, kind: input, shape index: {}]
  %s2 = inlined_call_operand.hbm [shape: bf16[384,128], index: 2, kind: output, shape index: {}]
  %s3 = sld [smem:[#allocation0]]
  $region26: #{tpu_custom_call.1} parent=0
    _
  %s5 = ssub.s32 1, %s3
  %s6 = scalar_select 0, %s5, %s3
  $region1: #{tpu_custom_call.1} parent=0
    #allocation2 [shape = 'u8[98304]{0}', space=vmem, size = 0x18000, scoped, tag = 'input window, operand 0, single buffered']
    #allocation3 [shape = 's32[1]{0}', space=sflag, size = 0x4, scoped, tag = 'scoped memory for tpu_custom_call.1']
    #allocation4 [shape = 's32[1]{0}', space=sflag, size = 0x4, scoped, tag = 'scoped memory for tpu_custom_call.1']
    #allocation5 [shape = 'u8[32768]{0}', space=vmem, size = 0x8000, scoped, tag = 'input window, operand 1, single buffered']
    #allocation6 [shape = 's32[1]{0}', space=sflag, size = 0x4, scoped, tag = 'scoped memory for tpu_custom_call.1']
    #allocation7 [shape = 'u8[98304]{0}', space=vmem, size = 0x18000, scoped, tag = 'output window, operand 0, single buffered']
    %7 = vsyncpa [#allocation3], 0
    %8 = vsyncpa [#allocation6], 0
    %9 = vsyncpa [#allocation4], 0
    // Predicated region
    $region2: #{tpu_custom_call.1} parent=1 // pred_check
      _
    $region3: #{tpu_custom_call.1} parent=1 // pred_check_branch
      %11 = sbr.rel (0) target = $region5
    $region4: #{tpu_custom_call.1} parent=1 // pred_region
      %s13 = ssub.s32 3072, 3072
      %14 = vsyncadd [#allocation3], %s13
      %s15 = sshll.u32 [#allocation2], 4
      %s16 = int_to_ptr.vmem [resolvable:$true] %s15
      %21 = dma.hbm_to_vmem [thread:$0]  %s0, 3072, %s16, [#allocation3], 64, 64, 4
    $region5: #{tpu_custom_call.1} parent=1 // pred_fallthru
      _
    // Predicated region
    $region6: #{tpu_custom_call.1} parent=1 // pred_check
      _
    $region7: #{tpu_custom_call.1} parent=1 // pred_check_branch
      %23 = sbr.rel (0) target = $region9
    $region8: #{tpu_custom_call.1} parent=1 // pred_region
      %s25 = ssub.s32 1024, 1024
      %26 = vsyncadd [#allocation6], %s25
      %s27 = sshll.u32 [#allocation5], 4
      %s28 = int_to_ptr.vmem [resolvable:$true] %s27
      %33 = dma.hbm_to_vmem [thread:$0]  %s1, 1024, %s28, [#allocation6], 64, 64, 4
    $region9: #{tpu_custom_call.1} parent=1 // pred_fallthru
      _
    // Predicated region
    $region10: #{tpu_custom_call.1} parent=1 // pred_check
      _
    $region11: #{tpu_custom_call.1} parent=1 // pred_check_branch
      %35 = sbr.rel (0) target = $region13
    $region12: #{tpu_custom_call.1} parent=1 // pred_region
      %36 = dma.done [#allocation3], 3072
    $region13: #{tpu_custom_call.1} parent=1 // pred_fallthru
      _
    // Predicated region
    $region14: #{tpu_custom_call.1} parent=1 // pred_check
      _
    $region15: #{tpu_custom_call.1} parent=1 // pred_check_branch
      %38 = sbr.rel (0) target = $region17
    $region16: #{tpu_custom_call.1} parent=1 // pred_region
      %39 = dma.done [#allocation6], 1024
    $region17: #{tpu_custom_call.1} parent=1 // pred_fallthru
      _
    %v41 = vld [vmem:[#allocation2] sm:$0xf]
    %v42 = vld [vmem:[#allocation2 + $0x4] sm:$0xf]
    %v43 = vld [vmem:[#allocation2 + $0x8] sm:$0xf]
    %v44 = vld [vmem:[#allocation2 + $0xc] sm:$0xf]
    %v45 = vld [vmem:[#allocation2 + $0x10] sm:$0xf]
    %v46 = vld [vmem:[#allocation2 + $0x14] sm:$0xf]
    %v47 = vld [vmem:[#allocation2 + $0x18] sm:$0xf]
    %v48 = vld [vmem:[#allocation2 + $0x1c] sm:$0xf]
    %v49 = vld [vmem:[#allocation2 + $0x20] sm:$0xf]
    %v50 = vld [vmem:[#allocation2 + $0x24] sm:$0xf]
    %v51 = vld [vmem:[#allocation2 + $0x28] sm:$0xf]
    %v52 = vld [vmem:[#allocation2 + $0x2c] sm:$0xf]
    %v53 = vld [vmem:[#allocation2 + $0x30] sm:$0xf]
    %v54 = vld [vmem:[#allocation2 + $0x34] sm:$0xf]
    %v55 = vld [vmem:[#allocation2 + $0x38] sm:$0xf]
    %v56 = vld [vmem:[#allocation2 + $0x3c] sm:$0xf]
    %v57 = vld [vmem:[#allocation2 + $0x40] sm:$0xf]
    %v58 = vld [vmem:[#allocation2 + $0x44] sm:$0xf]
    %v59 = vld [vmem:[#allocation2 + $0x48] sm:$0xf]
    %v60 = vld [vmem:[#allocation2 + $0x4c] sm:$0xf]
    %v61 = vld [vmem:[#allocation2 + $0x50] sm:$0xf]
    %v62 = vld [vmem:[#allocation2 + $0x54] sm:$0xf]
    %v63 = vld [vmem:[#allocation2 + $0x58] sm:$0xf]
    %v64 = vld [vmem:[#allocation2 + $0x5c] sm:$0xf]
    %v65 = vld [vmem:[#allocation2 + $0x60] sm:$0xf]
    %v66 = vld [vmem:[#allocation2 + $0x64] sm:$0xf]
    %v67 = vld [vmem:[#allocation2 + $0x68] sm:$0xf]
    %v68 = vld [vmem:[#allocation2 + $0x6c] sm:$0xf]
    %v69 = vld [vmem:[#allocation2 + $0x70] sm:$0xf]
    %v70 = vld [vmem:[#allocation2 + $0x74] sm:$0xf]
    %v71 = vld [vmem:[#allocation2 + $0x78] sm:$0xf]
    %v72 = vld [vmem:[#allocation2 + $0x7c] sm:$0xf]
    %v73 = vld [vmem:[#allocation2 + $0x80] sm:$0xf]
    %v74 = vld [vmem:[#allocation2 + $0x84] sm:$0xf]
    %v75 = vld [vmem:[#allocation2 + $0x88] sm:$0xf]
    %v76 = vld [vmem:[#allocation2 + $0x8c] sm:$0xf]
    %v77 = vld [vmem:[#allocation2 + $0x90] sm:$0xf]
    %v78 = vld [vmem:[#allocation2 + $0x94] sm:$0xf]
    %v79 = vld [vmem:[#allocation2 + $0x98] sm:$0xf]
    %v80 = vld [vmem:[#allocation2 + $0x9c] sm:$0xf]
    %v81 = vld [vmem:[#allocation2 + $0xa0] sm:$0xf]
    %v82 = vld [vmem:[#allocation2 + $0xa4] sm:$0xf]
    %v83 = vld [vmem:[#allocation2 + $0xa8] sm:$0xf]
    %v84 = vld [vmem:[#allocation2 + $0xac] sm:$0xf]
    %v85 = vld [vmem:[#allocation2 + $0xb0] sm:$0xf]
    %v86 = vld [vmem:[#allocation2 + $0xb4] sm:$0xf]
    %v87 = vld [vmem:[#allocation2 + $0xb8] sm:$0xf]
    %v88 = vld [vmem:[#allocation2 + $0xbc] sm:$0xf]
    %v89 = vld [vmem:[#allocation5] sm:$0xf]
    %v90 = vld [vmem:[#allocation5 + $0x4] sm:$0xf]
    %v91 = vld [vmem:[#allocation5 + $0x8] sm:$0xf]
    %v92 = vld [vmem:[#allocation5 + $0xc] sm:$0xf]
    %v93 = vld [vmem:[#allocation5 + $0x10] sm:$0xf]
    %v94 = vld [vmem:[#allocation5 + $0x14] sm:$0xf]
    %v95 = vld [vmem:[#allocation5 + $0x18] sm:$0xf]
    %v96 = vld [vmem:[#allocation5 + $0x1c] sm:$0xf]
    %v97 = vld [vmem:[#allocation5 + $0x20] sm:$0xf]
    %v98 = vld [vmem:[#allocation5 + $0x24] sm:$0xf]
    %v99 = vld [vmem:[#allocation5 + $0x28] sm:$0xf]
    %v100 = vld [vmem:[#allocation5 + $0x2c] sm:$0xf]
    %v101 = vld [vmem:[#allocation5 + $0x30] sm:$0xf]
    %v102 = vld [vmem:[#allocation5 + $0x34] sm:$0xf]
    %v103 = vld [vmem:[#allocation5 + $0x38] sm:$0xf]
    %v104 = vld [vmem:[#allocation5 + $0x3c] sm:$0xf]
    %v153 = vunpack.c.l.b16 %v41
    %v154 = vunpack.c.l.b16 %v42
    %v155 = vunpack.c.l.b16 %v43
    %v156 = vunpack.c.l.b16 %v44
    %v157 = vunpack.c.l.b16 %v45
    %v158 = vunpack.c.l.b16 %v46
    %v159 = vunpack.c.l.b16 %v47
    %v160 = vunpack.c.l.b16 %v48
    %v161 = vunpack.c.l.b16 %v49
    %v162 = vunpack.c.l.b16 %v50
    %v163 = vunpack.c.l.b16 %v51
    %v164 = vunpack.c.l.b16 %v52
    %v165 = vunpack.c.l.b16 %v53
    %v166 = vunpack.c.l.b16 %v54
    %v167 = vunpack.c.l.b16 %v55
    %v168 = vunpack.c.l.b16 %v56
    %v169 = vunpack.c.l.b16 %v57
    %v170 = vunpack.c.l.b16 %v58
    %v171 = vunpack.c.l.b16 %v59
    %v172 = vunpack.c.l.b16 %v60
    %v173 = vunpack.c.l.b16 %v61
    %v174 = vunpack.c.l.b16 %v62
    %v175 = vunpack.c.l.b16 %v63
    %v176 = vunpack.c.l.b16 %v64
    %v177 = vunpack.c.l.b16 %v65
    %v178 = vunpack.c.l.b16 %v66
    %v179 = vunpack.c.l.b16 %v67
    %v180 = vunpack.c.l.b16 %v68
    %v181 = vunpack.c.l.b16 %v69
    %v182 = vunpack.c.l.b16 %v70
    %v183 = vunpack.c.l.b16 %v71
    %v184 = vunpack.c.l.b16 %v72
    %v185 = vunpack.c.l.b16 %v73
    %v186 = vunpack.c.l.b16 %v74
    %v187 = vunpack.c.l.b16 %v75
    %v188 = vunpack.c.l.b16 %v76
    %v189 = vunpack.c.l.b16 %v77
    %v190 = vunpack.c.l.b16 %v78
    %v191 = vunpack.c.l.b16 %v79
    %v192 = vunpack.c.l.b16 %v80
    %v193 = vunpack.c.l.b16 %v81
    %v194 = vunpack.c.l.b16 %v82
    %v195 = vunpack.c.l.b16 %v83
    %v196 = vunpack.c.l.b16 %v84
    %v197 = vunpack.c.l.b16 %v85
    %v198 = vunpack.c.l.b16 %v86
    %v199 = vunpack.c.l.b16 %v87
    %v200 = vunpack.c.l.b16 %v88
    %v201 = vpack.c.b16 %v154, %v153
    %v202 = vpack.c.b16 %v156, %v155
    %v203 = vpack.c.b16 %v158, %v157
    %v204 = vpack.c.b16 %v160, %v159
    %v205 = vpack.c.b16 %v162, %v161
    %v206 = vpack.c.b16 %v164, %v163
    %v207 = vpack.c.b16 %v166, %v165
    %v208 = vpack.c.b16 %v168, %v167
    %v209 = vpack.c.b16 %v170, %v169
    %v210 = vpack.c.b16 %v172, %v171
    %v211 = vpack.c.b16 %v174, %v173
    %v212 = vpack.c.b16 %v176, %v175
    %v213 = vpack.c.b16 %v178, %v177
    %v214 = vpack.c.b16 %v180, %v179
    %v215 = vpack.c.b16 %v182, %v181
    %v216 = vpack.c.b16 %v184, %v183
    %v217 = vpack.c.b16 %v186, %v185
    %v218 = vpack.c.b16 %v188, %v187
    %v219 = vpack.c.b16 %v190, %v189
    %v220 = vpack.c.b16 %v192, %v191
    %v221 = vpack.c.b16 %v194, %v193
    %v222 = vpack.c.b16 %v196, %v195
    %v223 = vpack.c.b16 %v198, %v197
    %v224 = vpack.c.b16 %v200, %v199
    %v265 = vunpack.c.l.b16 %v89
    %v266 = vunpack.c.l.b16 %v90
    %v267 = vunpack.c.l.b16 %v91
    %v268 = vunpack.c.l.b16 %v92
    %v269 = vunpack.c.l.b16 %v93
    %v270 = vunpack.c.l.b16 %v94
    %v271 = vunpack.c.l.b16 %v95
    %v272 = vunpack.c.l.b16 %v96
    %v273 = vunpack.c.l.b16 %v97
    %v274 = vunpack.c.l.b16 %v98
    %v275 = vunpack.c.l.b16 %v99
    %v276 = vunpack.c.l.b16 %v100
    %v277 = vunpack.c.l.b16 %v101
    %v278 = vunpack.c.l.b16 %v102
    %v279 = vunpack.c.l.b16 %v103
    %v280 = vunpack.c.l.b16 %v104
    %v281 = vpack.c.b16 %v266, %v265
    %v282 = vpack.c.b16 %v268, %v267
    %v283 = vpack.c.b16 %v270, %v269
    %v284 = vpack.c.b16 %v272, %v271
    %v285 = vpack.c.b16 %v274, %v273
    %v286 = vpack.c.b16 %v276, %v275
    %v287 = vpack.c.b16 %v278, %v277
    %v288 = vpack.c.b16 %v280, %v279
    %297 = vmatprep.subr.bf16.mxu0 0
    %298 = vmatpush1.bf16.msra.mxu0 %v288
    %299 = vmatprep.subr.bf16.mxu0 0
    %300 = vmatpush1.bf16.msra.mxu0 %v287
    %301 = vmatprep.subr.bf16.mxu0 0
    %302 = vmatpush1.bf16.msra.mxu0 %v286
    %303 = vmatprep.subr.bf16.mxu0 0
    %304 = vmatpush1.bf16.msra.mxu0 %v285
    %305 = vmatprep.subr.bf16.mxu0 0
    %306 = vmatpush1.bf16.msra.mxu0 %v284
    %307 = vmatprep.subr.bf16.mxu0 0
    %308 = vmatpush1.bf16.msra.mxu0 %v283
    %309 = vmatprep.subr.bf16.mxu0 0
    %310 = vmatpush1.bf16.msra.mxu0 %v282
    %311 = vmatprep.subr.bf16.mxu0 0
    %312 = vmatpush1.bf16.msra.mxu0 %v281
    %313 = vmatprep.subr.bf16.mxu0 0
    %314 = vmatpush2.bf16.msra.mxu0 0
    %315 = vmatprep.subr.bf16.mxu0 0
    %316 = vmatpush2.bf16.msra.mxu0 0
    %317 = vmatprep.subr.bf16.mxu0 0
    %318 = vmatpush2.bf16.msra.mxu0 0
    %319 = vmatprep.subr.bf16.mxu0 0
    %320 = vmatpush2.bf16.msra.mxu0 0
    %321 = vmatprep.subr.bf16.mxu0 0
    %322 = vmatpush2.bf16.msra.mxu0 0
    %323 = vmatprep.subr.bf16.mxu0 0
    %324 = vmatpush2.bf16.msra.mxu0 0
    %325 = vmatprep.subr.bf16.mxu0 0
    %326 = vmatpush2.bf16.msra.mxu0 0
    %327 = vmatprep.subr.bf16.mxu0 0
    %328 = vmatpush2.bf16.msra.mxu0 0
    %329 = vmatprep.mubr.bf16.mxu0 0
    %330 = vmatmul.mubr.bf16.gmra.mxu0 %v201
    %v331 = vpop.f32.mrf.mxu0
    %v332 = vadd.f32 0.0, %v331
    %v333 = vpop.f32.mrf.mxu0
    %v334 = vpop.f32.mrf.mxu0
    %v335 = vadd.f32 0.0, %v334
    %v336 = vpop.f32.mrf.mxu0
    %337 = vmatprep.mubr.bf16.mxu0 0
    %338 = vmatmul.mubr.bf16.gmra.mxu0 %v202
    %v339 = vpop.f32.mrf.mxu0
    %v340 = vadd.f32 0.0, %v339
    %v341 = vpop.f32.mrf.mxu0
    %v342 = vpop.f32.mrf.mxu0
    %v343 = vadd.f32 0.0, %v342
    %v344 = vpop.f32.mrf.mxu0
    %345 = vmatprep.mubr.bf16.mxu0 0
    %346 = vmatmul.mubr.bf16.gmra.mxu0 %v203
    %v347 = vpop.f32.mrf.mxu0
    %v348 = vadd.f32 0.0, %v347
    %v349 = vpop.f32.mrf.mxu0
    %v350 = vpop.f32.mrf.mxu0
    %v351 = vadd.f32 0.0, %v350
    %v352 = vpop.f32.mrf.mxu0
    %353 = vmatprep.mubr.bf16.mxu0 0
    %354 = vmatmul.mubr.bf16.gmra.mxu0 %v204
    %v355 = vpop.f32.mrf.mxu0
    %v356 = vadd.f32 0.0, %v355
    %v357 = vpop.f32.mrf.mxu0
    %v358 = vpop.f32.mrf.mxu0
    %v359 = vadd.f32 0.0, %v358
    %v360 = vpop.f32.mrf.mxu0
    %361 = vmatprep.mubr.bf16.mxu0 0
    %362 = vmatmul.mubr.bf16.gmra.mxu0 %v205
    %v363 = vpop.f32.mrf.mxu0
    %v364 = vadd.f32 0.0, %v363
    %v365 = vpop.f32.mrf.mxu0
    %v366 = vpop.f32.mrf.mxu0
    %v367 = vadd.f32 0.0, %v366
    %v368 = vpop.f32.mrf.mxu0
    %369 = vmatprep.mubr.bf16.mxu0 0
    %370 = vmatmul.mubr.bf16.gmra.mxu0 %v206
    %v371 = vpop.f32.mrf.mxu0
    %v372 = vadd.f32 0.0, %v371
    %v373 = vpop.f32.mrf.mxu0
    %v374 = vpop.f32.mrf.mxu0
    %v375 = vadd.f32 0.0, %v374
    %v376 = vpop.f32.mrf.mxu0
    %377 = vmatprep.mubr.bf16.mxu0 0
    %378 = vmatmul.mubr.bf16.gmra.mxu0 %v207
    %v379 = vpop.f32.mrf.mxu0
    %v380 = vadd.f32 0.0, %v379
    %v381 = vpop.f32.mrf.mxu0
    %v382 = vpop.f32.mrf.mxu0
    %v383 = vadd.f32 0.0, %v382
    %v384 = vpop.f32.mrf.mxu0
    %385 = vmatprep.mubr.bf16.mxu0 0
    %386 = vmatmul.mubr.bf16.gmra.mxu0 %v208
    %v387 = vpop.f32.mrf.mxu0
    %v388 = vadd.f32 0.0, %v387
    %v389 = vpop.f32.mrf.mxu0
    %v390 = vpop.f32.mrf.mxu0
    %v391 = vadd.f32 0.0, %v390
    %v392 = vpop.f32.mrf.mxu0
    %393 = vmatprep.mubr.bf16.mxu0 0
    %394 = vmatmul.mubr.bf16.gmra.mxu0 %v209
    %v395 = vpop.f32.mrf.mxu0
    %v396 = vadd.f32 0.0, %v395
    %v397 = vpop.f32.mrf.mxu0
    %v398 = vpop.f32.mrf.mxu0
    %v399 = vadd.f32 0.0, %v398
    %v400 = vpop.f32.mrf.mxu0
    %401 = vmatprep.mubr.bf16.mxu0 0
    %402 = vmatmul.mubr.bf16.gmra.mxu0 %v210
    %v403 = vpop.f32.mrf.mxu0
    %v404 = vadd.f32 0.0, %v403
    %v405 = vpop.f32.mrf.mxu0
    %v406 = vpop.f32.mrf.mxu0
    %v407 = vadd.f32 0.0, %v406
    %v408 = vpop.f32.mrf.mxu0
    %409 = vmatprep.mubr.bf16.mxu0 0
    %410 = vmatmul.mubr.bf16.gmra.mxu0 %v211
    %v411 = vpop.f32.mrf.mxu0
    %v412 = vadd.f32 0.0, %v411
    %v413 = vpop.f32.mrf.mxu0
    %v414 = vpop.f32.mrf.mxu0
    %v415 = vadd.f32 0.0, %v414
    %v416 = vpop.f32.mrf.mxu0
    %417 = vmatprep.mubr.bf16.mxu0 0
    %418 = vmatmul.mubr.bf16.gmra.mxu0 %v212
    %v419 = vpop.f32.mrf.mxu0
    %v420 = vadd.f32 0.0, %v419
    %v421 = vpop.f32.mrf.mxu0
    %v422 = vpop.f32.mrf.mxu0
    %v423 = vadd.f32 0.0, %v422
    %v424 = vpop.f32.mrf.mxu0
    %425 = vmatprep.mubr.bf16.mxu0 0
    %426 = vmatmul.mubr.bf16.gmra.mxu0 %v213
    %v427 = vpop.f32.mrf.mxu0
    %v428 = vadd.f32 0.0, %v427
    %v429 = vpop.f32.mrf.mxu0
    %v430 = vpop.f32.mrf.mxu0
    %v431 = vadd.f32 0.0, %v430
    %v432 = vpop.f32.mrf.mxu0
    %433 = vmatprep.mubr.bf16.mxu0 0
    %434 = vmatmul.mubr.bf16.gmra.mxu0 %v214
    %v435 = vpop.f32.mrf.mxu0
    %v436 = vadd.f32 0.0, %v435
    %v437 = vpop.f32.mrf.mxu0
    %v438 = vpop.f32.mrf.mxu0
    %v439 = vadd.f32 0.0, %v438
    %v440 = vpop.f32.mrf.mxu0
    %441 = vmatprep.mubr.bf16.mxu0 0
    %442 = vmatmul.mubr.bf16.gmra.mxu0 %v215
    %v443 = vpop.f32.mrf.mxu0
    %v444 = vadd.f32 0.0, %v443
    %v445 = vpop.f32.mrf.mxu0
    %v446 = vpop.f32.mrf.mxu0
    %v447 = vadd.f32 0.0, %v446
    %v448 = vpop.f32.mrf.mxu0
    %449 = vmatprep.mubr.bf16.mxu0 0
    %450 = vmatmul.mubr.bf16.gmra.mxu0 %v216
    %v451 = vpop.f32.mrf.mxu0
    %v452 = vadd.f32 0.0, %v451
    %v453 = vpop.f32.mrf.mxu0
    %v454 = vpop.f32.mrf.mxu0
    %v455 = vadd.f32 0.0, %v454
    %v456 = vpop.f32.mrf.mxu0
    %457 = vmatprep.mubr.bf16.mxu0 0
    %458 = vmatmul.mubr.bf16.gmra.mxu0 %v217
    %v459 = vpop.f32.mrf.mxu0
    %v460 = vadd.f32 0.0, %v459
    %v461 = vpop.f32.mrf.mxu0
    %v462 = vpop.f32.mrf.mxu0
    %v463 = vadd.f32 0.0, %v462
    %v464 = vpop.f32.mrf.mxu0
    %465 = vmatprep.mubr.bf16.mxu0 0
    %466 = vmatmul.mubr.bf16.gmra.mxu0 %v218
    %v467 = vpop.f32.mrf.mxu0
    %v468 = vadd.f32 0.0, %v467
    %v469 = vpop.f32.mrf.mxu0
    %v470 = vpop.f32.mrf.mxu0
    %v471 = vadd.f32 0.0, %v470
    %v472 = vpop.f32.mrf.mxu0
    %473 = vmatprep.mubr.bf16.mxu0 0
    %474 = vmatmul.mubr.bf16.gmra.mxu0 %v219
    %v475 = vpop.f32.mrf.mxu0
    %v476 = vadd.f32 0.0, %v475
    %v477 = vpop.f32.mrf.mxu0
    %v478 = vpop.f32.mrf.mxu0
    %v479 = vadd.f32 0.0, %v478
    %v480 = vpop.f32.mrf.mxu0
    %481 = vmatprep.mubr.bf16.mxu0 0
    %482 = vmatmul.mubr.bf16.gmra.mxu0 %v220
    %v483 = vpop.f32.mrf.mxu0
    %v484 = vadd.f32 0.0, %v483
    %v485 = vpop.f32.mrf.mxu0
    %v486 = vpop.f32.mrf.mxu0
    %v487 = vadd.f32 0.0, %v486
    %v488 = vpop.f32.mrf.mxu0
    %489 = vmatprep.mubr.bf16.mxu0 0
    %490 = vmatmul.mubr.bf16.gmra.mxu0 %v221
    %v491 = vpop.f32.mrf.mxu0
    %v492 = vadd.f32 0.0, %v491
    %v493 = vpop.f32.mrf.mxu0
    %v494 = vpop.f32.mrf.mxu0
    %v495 = vadd.f32 0.0, %v494
    %v496 = vpop.f32.mrf.mxu0
    %497 = vmatprep.mubr.bf16.mxu0 0
    %498 = vmatmul.mubr.bf16.gmra.mxu0 %v222
    %v499 = vpop.f32.mrf.mxu0
    %v500 = vadd.f32 0.0, %v499
    %v501 = vpop.f32.mrf.mxu0
    %v502 = vpop.f32.mrf.mxu0
    %v503 = vadd.f32 0.0, %v502
    %v504 = vpop.f32.mrf.mxu0
    %505 = vmatprep.mubr.bf16.mxu0 0
    %506 = vmatmul.mubr.bf16.gmra.mxu0 %v223
    %v507 = vpop.f32.mrf.mxu0
    %v508 = vadd.f32 0.0, %v507
    %v509 = vpop.f32.mrf.mxu0
    %v510 = vpop.f32.mrf.mxu0
    %v511 = vadd.f32 0.0, %v510
    %v512 = vpop.f32.mrf.mxu0
    %513 = vmatprep.mubr.bf16.mxu0 0
    %514 = vmatmul.mubr.bf16.gmra.mxu0 %v224
    %v515 = vpop.f32.mrf.mxu0
    %v516 = vadd.f32 0.0, %v515
    %v517 = vpop.f32.mrf.mxu0
    %v518 = vpop.f32.mrf.mxu0
    %v519 = vadd.f32 0.0, %v518
    %v520 = vpop.f32.mrf.mxu0
    %521 = vdwg.mxu0
    %v522 = vpack.c.bf16 %v335, %v332
    %v523 = vpack.c.bf16 %v343, %v340
    %v524 = vpack.c.bf16 %v351, %v348
    %v525 = vpack.c.bf16 %v359, %v356
    %v526 = vpack.c.bf16 %v367, %v364
    %v527 = vpack.c.bf16 %v375, %v372
    %v528 = vpack.c.bf16 %v383, %v380
    %v529 = vpack.c.bf16 %v391, %v388
    %v530 = vpack.c.bf16 %v399, %v396
    %v531 = vpack.c.bf16 %v407, %v404
    %v532 = vpack.c.bf16 %v415, %v412
    %v533 = vpack.c.bf16 %v423, %v420
    %v534 = vpack.c.bf16 %v431, %v428
    %v535 = vpack.c.bf16 %v439, %v436
    %v536 = vpack.c.bf16 %v447, %v444
    %v537 = vpack.c.bf16 %v455, %v452
    %v538 = vpack.c.bf16 %v463, %v460
    %v539 = vpack.c.bf16 %v471, %v468
    %v540 = vpack.c.bf16 %v479, %v476
    %v541 = vpack.c.bf16 %v487, %v484
    %v542 = vpack.c.bf16 %v495, %v492
    %v543 = vpack.c.bf16 %v503, %v500
    %v544 = vpack.c.bf16 %v511, %v508
    %v545 = vpack.c.bf16 %v519, %v516
    %v570 = vunpack.c.l.b16 %v522
    %v571 = vunpack.c.h.b16 %v522
    %v572 = vunpack.c.l.b16 %v523
    %v573 = vunpack.c.h.b16 %v523
    %v574 = vunpack.c.l.b16 %v524
    %v575 = vunpack.c.h.b16 %v524
    %v576 = vunpack.c.l.b16 %v525
    %v577 = vunpack.c.h.b16 %v525
    %v578 = vunpack.c.l.b16 %v526
    %v579 = vunpack.c.h.b16 %v526
    %v580 = vunpack.c.l.b16 %v527
    %v581 = vunpack.c.h.b16 %v527
    %v582 = vunpack.c.l.b16 %v528
    %v583 = vunpack.c.h.b16 %v528
    %v584 = vunpack.c.l.b16 %v529
    %v585 = vunpack.c.h.b16 %v529
    %v586 = vunpack.c.l.b16 %v530
    %v587 = vunpack.c.h.b16 %v530
    %v588 = vunpack.c.l.b16 %v531
    %v589 = vunpack.c.h.b16 %v531
    %v590 = vunpack.c.l.b16 %v532
    %v591 = vunpack.c.h.b16 %v532
    %v592 = vunpack.c.l.b16 %v533
    %v593 = vunpack.c.h.b16 %v533
    %v594 = vunpack.c.l.b16 %v534
    %v595 = vunpack.c.h.b16 %v534
    %v596 = vunpack.c.l.b16 %v535
    %v597 = vunpack.c.h.b16 %v535
    %v598 = vunpack.c.l.b16 %v536
    %v599 = vunpack.c.h.b16 %v536
    %v600 = vunpack.c.l.b16 %v537
    %v601 = vunpack.c.h.b16 %v537
    %v602 = vunpack.c.l.b16 %v538
    %v603 = vunpack.c.h.b16 %v538
    %v604 = vunpack.c.l.b16 %v539
    %v605 = vunpack.c.h.b16 %v539
    %v606 = vunpack.c.l.b16 %v540
    %v607 = vunpack.c.h.b16 %v540
    %v608 = vunpack.c.l.b16 %v541
    %v609 = vunpack.c.h.b16 %v541
    %v610 = vunpack.c.l.b16 %v542
    %v611 = vunpack.c.h.b16 %v542
    %v612 = vunpack.c.l.b16 %v543
    %v613 = vunpack.c.h.b16 %v543
    %v614 = vunpack.c.l.b16 %v544
    %v615 = vunpack.c.h.b16 %v544
    %v616 = vunpack.c.l.b16 %v545
    %v617 = vunpack.c.h.b16 %v545
    %v618 = vpack.c.b16 %v570, %v570
    %v619 = vpack.c.b16 %v571, %v571
    %v620 = vpack.c.b16 %v572, %v572
    %v621 = vpack.c.b16 %v573, %v573
    %v622 = vpack.c.b16 %v574, %v574
    %v623 = vpack.c.b16 %v575, %v575
    %v624 = vpack.c.b16 %v576, %v576
    %v625 = vpack.c.b16 %v577, %v577
    %v626 = vpack.c.b16 %v578, %v578
    %v627 = vpack.c.b16 %v579, %v579
    %v628 = vpack.c.b16 %v580, %v580
    %v629 = vpack.c.b16 %v581, %v581
    %v630 = vpack.c.b16 %v582, %v582
    %v631 = vpack.c.b16 %v583, %v583
    %v632 = vpack.c.b16 %v584, %v584
    %v633 = vpack.c.b16 %v585, %v585
    %v634 = vpack.c.b16 %v586, %v586
    %v635 = vpack.c.b16 %v587, %v587
    %v636 = vpack.c.b16 %v588, %v588
    %v637 = vpack.c.b16 %v589, %v589
    %v638 = vpack.c.b16 %v590, %v590
    %v639 = vpack.c.b16 %v591, %v591
    %v640 = vpack.c.b16 %v592, %v592
    %v641 = vpack.c.b16 %v593, %v593
    %v642 = vpack.c.b16 %v594, %v594
    %v643 = vpack.c.b16 %v595, %v595
    %v644 = vpack.c.b16 %v596, %v596
    %v645 = vpack.c.b16 %v597, %v597
    %v646 = vpack.c.b16 %v598, %v598
    %v647 = vpack.c.b16 %v599, %v599
    %v648 = vpack.c.b16 %v600, %v600
    %v649 = vpack.c.b16 %v601, %v601
    %v650 = vpack.c.b16 %v602, %v602
    %v651 = vpack.c.b16 %v603, %v603
    %v652 = vpack.c.b16 %v604, %v604
    %v653 = vpack.c.b16 %v605, %v605
    %v654 = vpack.c.b16 %v606, %v606
    %v655 = vpack.c.b16 %v607, %v607
    %v656 = vpack.c.b16 %v608, %v608
    %v657 = vpack.c.b16 %v609, %v609
    %v658 = vpack.c.b16 %v610, %v610
    %v659 = vpack.c.b16 %v611, %v611
    %v660 = vpack.c.b16 %v612, %v612
    %v661 = vpack.c.b16 %v613, %v613
    %v662 = vpack.c.b16 %v614, %v614
    %v663 = vpack.c.b16 %v615, %v615
    %v664 = vpack.c.b16 %v616, %v616
    %v665 = vpack.c.b16 %v617, %v617
    %714 = vst [vmem:[#allocation7] sm:$0xf] %v618
    %715 = vst [vmem:[#allocation7 + $0x4] sm:$0xf] %v619
    %716 = vst [vmem:[#allocation7 + $0x8] sm:$0xf] %v620
    %717 = vst [vmem:[#allocation7 + $0xc] sm:$0xf] %v621
    %718 = vst [vmem:[#allocation7 + $0x10] sm:$0xf] %v622
    %719 = vst [vmem:[#allocation7 + $0x14] sm:$0xf] %v623
    %720 = vst [vmem:[#allocation7 + $0x18] sm:$0xf] %v624
    %721 = vst [vmem:[#allocation7 + $0x1c] sm:$0xf] %v625
    %722 = vst [vmem:[#allocation7 + $0x20] sm:$0xf] %v626
    %723 = vst [vmem:[#allocation7 + $0x24] sm:$0xf] %v627
    %724 = vst [vmem:[#allocation7 + $0x28] sm:$0xf] %v628
    %725 = vst [vmem:[#allocation7 + $0x2c] sm:$0xf] %v629
    %726 = vst [vmem:[#allocation7 + $0x30] sm:$0xf] %v630
    %727 = vst [vmem:[#allocation7 + $0x34] sm:$0xf] %v631
    %728 = vst [vmem:[#allocation7 + $0x38] sm:$0xf] %v632
    %729 = vst [vmem:[#allocation7 + $0x3c] sm:$0xf] %v633
    %730 = vst [vmem:[#allocation7 + $0x40] sm:$0xf] %v634
    %731 = vst [vmem:[#allocation7 + $0x44] sm:$0xf] %v635
    %732 = vst [vmem:[#allocation7 + $0x48] sm:$0xf] %v636
    %733 = vst [vmem:[#allocation7 + $0x4c] sm:$0xf] %v637
    %734 = vst [vmem:[#allocation7 + $0x50] sm:$0xf] %v638
    %735 = vst [vmem:[#allocation7 + $0x54] sm:$0xf] %v639
    %736 = vst [vmem:[#allocation7 + $0x58] sm:$0xf] %v640
    %737 = vst [vmem:[#allocation7 + $0x5c] sm:$0xf] %v641
    %738 = vst [vmem:[#allocation7 + $0x60] sm:$0xf] %v642
    %739 = vst [vmem:[#allocation7 + $0x64] sm:$0xf] %v643
    %740 = vst [vmem:[#allocation7 + $0x68] sm:$0xf] %v644
    %741 = vst [vmem:[#allocation7 + $0x6c] sm:$0xf] %v645
    %742 = vst [vmem:[#allocation7 + $0x70] sm:$0xf] %v646
    %743 = vst [vmem:[#allocation7 + $0x74] sm:$0xf] %v647
    %744 = vst [vmem:[#allocation7 + $0x78] sm:$0xf] %v648
    %745 = vst [vmem:[#allocation7 + $0x7c] sm:$0xf] %v649
    %746 = vst [vmem:[#allocation7 + $0x80] sm:$0xf] %v650
    %747 = vst [vmem:[#allocation7 + $0x84] sm:$0xf] %v651
    %748 = vst [vmem:[#allocation7 + $0x88] sm:$0xf] %v652
    %749 = vst [vmem:[#allocation7 + $0x8c] sm:$0xf] %v653
    %750 = vst [vmem:[#allocation7 + $0x90] sm:$0xf] %v654
    %751 = vst [vmem:[#allocation7 + $0x94] sm:$0xf] %v655
    %752 = vst [vmem:[#allocation7 + $0x98] sm:$0xf] %v656
    %753 = vst [vmem:[#allocation7 + $0x9c] sm:$0xf] %v657
    %754 = vst [vmem:[#allocation7 + $0xa0] sm:$0xf] %v658
    %755 = vst [vmem:[#allocation7 + $0xa4] sm:$0xf] %v659
    %756 = vst [vmem:[#allocation7 + $0xa8] sm:$0xf] %v660
    %757 = vst [vmem:[#allocation7 + $0xac] sm:$0xf] %v661
    %758 = vst [vmem:[#allocation7 + $0xb0] sm:$0xf] %v662
    %759 = vst [vmem:[#allocation7 + $0xb4] sm:$0xf] %v663
    %760 = vst [vmem:[#allocation7 + $0xb8] sm:$0xf] %v664
    %761 = vst [vmem:[#allocation7 + $0xbc] sm:$0xf] %v665
    // Predicated region
    $region18: #{tpu_custom_call.1} parent=1 // pred_check
      _
    $region19: #{tpu_custom_call.1} parent=1 // pred_check_branch
      %763 = sbr.rel (0) target = $region21
    $region20: #{tpu_custom_call.1} parent=1 // pred_region
      %s765 = ssub.s32 3072, 3072
      %766 = vsyncadd [#allocation4], %s765
      %s767 = sshll.u32 [#allocation7], 4
      %s768 = int_to_ptr.vmem [resolvable:$true] %s767
      %773 = dma.vmem_to_hbm [thread:$0]  %s768, 3072, %s2, [#allocation4], 64, 64, 4
    $region21: #{tpu_custom_call.1} parent=1 // pred_fallthru
      _
    // Predicated region
    $region22: #{tpu_custom_call.1} parent=1 // pred_check
      _
    $region23: #{tpu_custom_call.1} parent=1 // pred_check_branch
      %775 = sbr.rel (0) target = $region25
    $region24: #{tpu_custom_call.1} parent=1 // pred_region
      %776 = dma.done [#allocation4], 3072
    $region25: #{tpu_custom_call.1} parent=1 // pred_fallthru
      _
    %777 = vsyncpa [#allocation3], 1
    %778 = vsyncpa [#allocation6], 1
    %779 = vsyncpa [#allocation4], 1

</llo_original>
